<compile_context>
chip_gen: v5e
topology: v5e:2x2
jax: 0.10.0
libtpu: 0.0.40
codegen_flags: <defaults>
</compile_context>

<pallas_src>
import functools

import jax
import jax.numpy as jnp
import numpy as np
from jax import lax
from jax.experimental import pallas as pl
from jax.experimental.pallas import tpu as pltpu

LN_EPS = 1e-5          # torch nn.LayerNorm default
LEAKY_SLOPE = 0.01     # torch nn.LeakyReLU default
TEMPERATURE = 0.5      # CALNet Attention temperature softmax


def _round_up(x, m):
    return ((x + m - 1) // m) * m


def _choose_tb(b, tb_max):
    """Largest divisor of b that is <= tb_max and keeps the grid >= 2 steps."""
    best = 1
    for cand in range(1, min(tb_max, b) + 1):
        if b % cand == 0 and (b // cand >= 2 or b == 1):
            best = cand
    return best


def _layernorm(x, gamma_row, beta_row, eps):
    """Row-wise LayerNorm over the last dim; x (M, D) f32, gamma/beta (1, D)."""
    mu = jnp.mean(x, axis=-1, keepdims=True)
    xc = x - mu
    var = jnp.mean(xc * xc, axis=-1, keepdims=True)
    return xc * lax.rsqrt(var + eps) * gamma_row + beta_row


# ----------------------------------------------------------------------------
# Fused PreNorm(LayerNorm) + self-Attention kernel (TB batch elements / step)
# ----------------------------------------------------------------------------
def _prenorm_attn_kernel(x_ref, g_ref, b_ref, wqkv_ref, wout_ref, bout_ref,
                         o_ref, *, tb, n, heads, dim_head, scale, temperature,
                         mxu_dtype):
    inner = heads * dim_head
    rows = tb * n
    d = o_ref.shape[-1]

    x = x_ref[...].astype(jnp.float32)                        # (TB*N, D)
    xn = _layernorm(x, g_ref[...], b_ref[...], LN_EPS)        # f32 VPU math

    # Fused Q/K/V projection: one (TB*N, D) @ (D, 3*inner) matmul.  Weights
    # arrive already in mxu_dtype (cast wrapper-side) and stay resident in
    # VMEM across the whole grid (constant index_map).
    qkv = jnp.dot(xn.astype(mxu_dtype), wqkv_ref[...],
                  preferred_element_type=jnp.float32)         # (rows, 3*inner) f32
    q = qkv[:, :inner]                                        # vreg-aligned slices
    k = qkv[:, inner:2 * inner]
    v = qkv[:, 2 * inner:]

    # Block-diagonal mask so packed rows only attend within their own batch
    # element.  One (rows, rows) matmul per head feeds the MXU far better than
    # TB tiny (N, N) matmuls.  Skipped (statically) when TB == 1.
    if tb > 1:
        rid = lax.broadcasted_iota(jnp.int32, (rows, rows), 0) // n
        cid = lax.broadcasted_iota(jnp.int32, (rows, rows), 1) // n
        neg = jnp.where(rid == cid, 0.0, -1e30).astype(jnp.float32)
    else:
        neg = None

    # TODO(synk): at production sequence lengths the (rows, rows) f32 logits
    # block must be KV-chunked (flash-style online softmax), especially on
    # v7x's 64 MiB VMEM; fine at these shapes.
    logit_scale = scale / temperature
    y = jnp.zeros((rows, d), jnp.float32)
    for h in range(heads):                                    # heads small & static
        lo = h * dim_head
        qh = q[:, lo:lo + dim_head].astype(mxu_dtype)
        kh = k[:, lo:lo + dim_head].astype(mxu_dtype)
        vh = v[:, lo:lo + dim_head].astype(mxu_dtype)
        # Contract last dims directly -> no explicit k.T (XLU transpose).
        logits = lax.dot_general(
            qh, kh, (((1,), (1,)), ((), ())),
            preferred_element_type=jnp.float32) * logit_scale          # (rows, rows)
        if neg is not None:
            logits = logits + neg
        m = jnp.max(logits, axis=-1, keepdims=True)
        p = jnp.exp(logits - m)
        s = jnp.sum(p, axis=-1, keepdims=True)
        p = p * pl.reciprocal(s, approx=True)                 # EUP, not VALU div
        # TODO(synk): attention dropout omitted (dropout=0.0 / eval mode).
        ctx = jnp.dot(p.astype(mxu_dtype), vh,
                      preferred_element_type=jnp.float32)     # (rows, dim_head)
        # Accumulate the output projection per head via a sublane row-slice of
        # W_out (no lane-concat of the per-head contexts).
        y = y + jnp.dot(ctx.astype(mxu_dtype), wout_ref[lo:lo + dim_head, :],
                        preferred_element_type=jnp.float32)

    y = y + bout_ref[...]
    y = jnp.where(y > 0, y, LEAKY_SLOPE * y)
    # Block spans the full trailing (N, D) extent -> contiguous HBM writeback.
    # (D=32 < 128 still lowers to a few masked vst; padding D to 128 at
    #  production would make stores fully lane-dense.)
    o_ref[...] = y.astype(o_ref.dtype)


def prenorm_attention_forward(x, params, *, heads, dim_head,
                              temperature=TEMPERATURE,
                              mxu_dtype=jnp.bfloat16, tb_max=16):
    """Fused PreNorm(dim, Attention(...)) self-attention forward (context=None).

    One pallas_call, grid=(B // TB,), everything in VMEM.
    """
    # TODO(synk): cross-attention (context=...) not fused; use prenorm_apply +
    # a cross-attention fn for that path.
    b, n, d = x.shape
    inner = heads * dim_head
    w_qkv = params["w_qkv"].astype(mxu_dtype)        # (d, 3*inner) = [Wq|Wk|Wv]
    w_out = params["w_out"].astype(mxu_dtype)        # (inner, d)
    assert w_qkv.shape == (d, 3 * inner)
    assert w_out.shape == (inner, d)
    scale = dim_head ** (-0.5)

    tb = _choose_tb(b, tb_max)                       # keeps grid >= 2 when B >= 2
    grid_steps = b // tb
    rows = tb * n
    assert rows % 8 == 0 or rows == b * n, "row block must be sublane-aligned"

    x2 = x.reshape(b * n, d)                         # free row-major reshape

    # Advisory cost estimate so XLA schedules around the custom call.
    flops = int(2 * b * n * d * 3 * inner                       # QKV proj
                + 2 * 2 * heads * grid_steps * rows * rows * dim_head  # qk^T + p@v
                + 2 * b * n * inner * d                         # out proj
                + 10 * b * n * d)                               # LN / bias / lrelu
    transcendentals = int(heads * grid_steps * rows * (rows + 1))
    bytes_accessed = int(x2.size * x2.dtype.itemsize
                         + b * n * d * x.dtype.itemsize
                         + w_qkv.size * w_qkv.dtype.itemsize
                         + w_out.size * w_out.dtype.itemsize
                         + 3 * d * 4)

    kernel = functools.partial(_prenorm_attn_kernel, tb=tb, n=n, heads=heads,
                               dim_head=dim_head, scale=scale,
                               temperature=temperature, mxu_dtype=mxu_dtype)
    out = pl.pallas_call(
        kernel,
        out_shape=jax.ShapeDtypeStruct((b * n, d), x.dtype),
        grid=(grid_steps,),
        in_specs=[
            pl.BlockSpec((rows, d), lambda i: (i, 0)),           # x rows (TB batches)
            pl.BlockSpec((1, d), lambda i: (0, 0)),              # LN gamma
            pl.BlockSpec((1, d), lambda i: (0, 0)),              # LN beta
            pl.BlockSpec((d, 3 * inner), lambda i: (0, 0)),      # fused W_qkv (resident)
            pl.BlockSpec((inner, d), lambda i: (0, 0)),          # W_out (resident)
            pl.BlockSpec((1, d), lambda i: (0, 0)),              # b_out
        ],
        out_specs=pl.BlockSpec((rows, d), lambda i: (i, 0)),
        compiler_params=pltpu.CompilerParams(
            dimension_semantics=("parallel",)),                  # both v7x TCs get work
        cost_estimate=pl.CostEstimate(flops=flops,
                                      transcendentals=transcendentals,
                                      bytes_accessed=bytes_accessed),
    )(x2, params["ln_gamma"], params["ln_beta"], w_qkv, w_out, params["b_out"])
    return out.reshape(b, n, d)


# ----------------------------------------------------------------------------
# Standalone LayerNorm kernel == PreNorm.norm / PreNorm.norm_context
# (large row tiles per the review, for use with an arbitrary fn)
# ----------------------------------------------------------------------------
def _layernorm_kernel(x_ref, g_ref, b_ref, o_ref, *, eps):
    o_ref[...] = _layernorm(x_ref[...].astype(jnp.float32),
                            g_ref[...], b_ref[...], eps).astype(o_ref.dtype)


def pallas_layernorm(x, gamma_row, beta_row, *, eps=LN_EPS, tile_m=512):
    """LayerNorm over the last dim; HBM-bandwidth bound, so use big row tiles."""
    shape = x.shape
    d = shape[-1]
    x2 = x.reshape(-1, d)
    m = x2.shape[0]
    tile = min(tile_m, _round_up(m, 8))
    m_pad = _round_up(m, tile)
    if m_pad != m:
        x2 = jnp.pad(x2, ((0, m_pad - m), (0, 0)))   # padded rows give beta, sliced off
    out = pl.pallas_call(
        functools.partial(_layernorm_kernel, eps=eps),
        out_shape=jax.ShapeDtypeStruct((m_pad, d), x.dtype),
        grid=(m_pad // tile,),
        in_specs=[
            pl.BlockSpec((tile, d), lambda i: (i, 0)),
            pl.BlockSpec((1, d), lambda i: (0, 0)),
            pl.BlockSpec((1, d), lambda i: (0, 0)),
        ],
        out_specs=pl.BlockSpec((tile, d), lambda i: (i, 0)),
        compiler_params=pltpu.CompilerParams(
            dimension_semantics=("parallel",)),
    )(x2, gamma_row, beta_row)
    return out[:m].reshape(shape)


def prenorm_apply(x, ln_params, fn, *, context=None, context_ln_params=None,
                  **kwargs):
    """Literal PreNorm.forward: norm x (and optional context), then call fn."""
    xn = pallas_layernorm(x, ln_params["gamma"], ln_params["beta"])
    if context is not None:
        if context_ln_params is not None:
            context = pallas_layernorm(context, context_ln_params["gamma"],
                                       context_ln_params["beta"])
        kwargs = dict(kwargs, context=context)
    return fn(xn, **kwargs)


# ----------------------------------------------------------------------------
# Pure-JAX reference (torch semantics) for verification
# ----------------------------------------------------------------------------
def prenorm_attention_reference(x, params, *, heads, dim_head,
                                temperature=TEMPERATURE):
    b, n, d = x.shape
    inner = heads * dim_head
    scale = dim_head ** (-0.5)
    mu = x.mean(-1, keepdims=True)
    var = ((x - mu) ** 2).mean(-1, keepdims=True)
    xn = (x - mu) / jnp.sqrt(var + LN_EPS) * params["ln_gamma"][0] + params["ln_beta"][0]

    w_qkv = params["w_qkv"]
    q = xn @ w_qkv[:, :inner]
    k = xn @ w_qkv[:, inner:2 * inner]
    v = xn @ w_qkv[:, 2 * inner:]

    def split(t):
        return t.reshape(b, n, heads, dim_head).transpose(0, 2, 1, 3)

    qh, kh, vh = split(q), split(k), split(v)
    sim = jnp.einsum("bhid,bhjd->bhij", qh, kh) * scale
    attn = jax.nn.softmax(sim / temperature, axis=-1)
    out = jnp.einsum("bhij,bhjd->bhid", attn, vh)
    out = out.transpose(0, 2, 1, 3).reshape(b, n, inner)
    y = out @ params["w_out"] + params["b_out"][0]
    return jnp.where(y > 0, y, LEAKY_SLOPE * y)


# ----------------------------------------------------------------------------
if __name__ == "__main__":
    # Small shapes consistent with the module: batch=2, seq=8, dim=32,
    # heads=2, dim_head=64 -> inner_dim=128.
    B, N, DIM = 2, 8, 32
    HEADS, DIM_HEAD = 2, 64
    INNER = HEADS * DIM_HEAD

    key = jax.random.PRNGKey(0)
    k_x, k_q, k_kv, k_o, k_b, k_g, k_be = jax.random.split(key, 7)

    x = jax.random.normal(k_x, (B, N, DIM), dtype=jnp.float32)

    def init_linear(k, fan_in, fan_out):
        bound = 1.0 / np.sqrt(fan_in)
        return jax.random.uniform(k, (fan_in, fan_out), jnp.float32, -bound, bound)

    w_q = init_linear(k_q, DIM, INNER)
    w_kv = init_linear(k_kv, DIM, 2 * INNER)   # columns = [W_k | W_v]
    params = {
        "ln_gamma": 1.0 + 0.1 * jax.random.normal(k_g, (1, DIM), jnp.float32),
        "ln_beta": 0.1 * jax.random.normal(k_be, (1, DIM), jnp.float32),
        "w_qkv": jnp.concatenate([w_q, w_kv], axis=1),       # (DIM, 3*INNER)
        "w_out": init_linear(k_o, INNER, DIM),
        "b_out": jax.random.uniform(k_b, (1, DIM), jnp.float32,
                                    -1.0 / np.sqrt(INNER), 1.0 / np.sqrt(INNER)),
    }

    y_ref = prenorm_attention_reference(x, params, heads=HEADS, dim_head=DIM_HEAD)

    # Fused PreNorm + Attention, f32 MXU operands: tight parity with torch.
    y32 = prenorm_attention_forward(x, params, heads=HEADS, dim_head=DIM_HEAD,
                                    mxu_dtype=jnp.float32)
    y32 = jax.block_until_ready(y32)
    np.testing.assert_allclose(np.asarray(y32), np.asarray(y_ref),
                               rtol=2e-3, atol=2e-3)

    # Default fast path: bf16 MXU operands (wrapper-side weight cast), f32 accum.
    ybf = prenorm_attention_forward(x, params, heads=HEADS, dim_head=DIM_HEAD)
    ybf = jax.block_until_ready(ybf)
    np.testing.assert_allclose(np.asarray(ybf), np.asarray(y_ref),
                               rtol=5e-2, atol=5e-2)

    # Literal PreNorm path (standalone LayerNorm kernel + arbitrary fn).
    xn = prenorm_apply(x, {"gamma": params["ln_gamma"], "beta": params["ln_beta"]},
                       fn=lambda t: t)
    xn = jax.block_until_ready(xn)
    mu = x.mean(-1, keepdims=True)
    var = ((x - mu) ** 2).mean(-1, keepdims=True)
    xn_ref = (x - mu) / jnp.sqrt(var + LN_EPS) * params["ln_gamma"][0] + params["ln_beta"][0]
    np.testing.assert_allclose(np.asarray(xn), np.asarray(xn_ref),
                               rtol=1e-3, atol=1e-3)

    print("KERNEL_OK")
</pallas_src>

<mosaic_0001>
module attributes {stable_mosaic.version = 11 : i64} {
  func.func @_prenorm_attn_kernel(%arg0: i32, %arg1: memref<8x32xf32, #tpu.memory_space<vmem>>, %arg2: memref<1x32xf32, #tpu.memory_space<vmem>>, %arg3: memref<1x32xf32, #tpu.memory_space<vmem>>, %arg4: memref<32x384xf32, #tpu.memory_space<vmem>>, %arg5: memref<128x32xf32, #tpu.memory_space<vmem>>, %arg6: memref<1x32xf32, #tpu.memory_space<vmem>>, %arg7: memref<8x32xf32, #tpu.memory_space<vmem>>) attributes {dimension_semantics = [#tpu.dimension_semantics<parallel>], iteration_bounds = array<i64: 2>, scalar_prefetch = 0 : i64, scratch_operands = 0 : i64, tpu.core_type = #tpu.core_type<tc>, window_params = [{transform_indices = @transform_0, window_bounds = array<i64: 8, 32>}, {pipeline_mode = #tpu.pipeline_mode<synchronous>, transform_indices = @transform_1, window_bounds = array<i64: 1, 32>}, {pipeline_mode = #tpu.pipeline_mode<synchronous>, transform_indices = @transform_2, window_bounds = array<i64: 1, 32>}, {pipeline_mode = #tpu.pipeline_mode<synchronous>, transform_indices = @transform_3, window_bounds = array<i64: 32, 384>}, {pipeline_mode = #tpu.pipeline_mode<synchronous>, transform_indices = @transform_4, window_bounds = array<i64: 128, 32>}, {pipeline_mode = #tpu.pipeline_mode<synchronous>, transform_indices = @transform_5, window_bounds = array<i64: 1, 32>}, {transform_indices = @transform_6, window_bounds = array<i64: 8, 32>}]} {
    %c0 = arith.constant 0 : index
    %c0_0 = arith.constant 0 : index
    %0 = vector.load %arg1[%c0, %c0_0] : memref<8x32xf32, #tpu.memory_space<vmem>>, vector<8x32xf32>
    %c0_1 = arith.constant 0 : index
    %c0_2 = arith.constant 0 : index
    %1 = vector.load %arg2[%c0_1, %c0_2] : memref<1x32xf32, #tpu.memory_space<vmem>>, vector<1x32xf32>
    %c0_3 = arith.constant 0 : index
    %c0_4 = arith.constant 0 : index
    %2 = vector.load %arg3[%c0_3, %c0_4] : memref<1x32xf32, #tpu.memory_space<vmem>>, vector<1x32xf32>
    %cst = arith.constant dense<0.000000e+00> : vector<8xf32>
    %3 = vector.multi_reduction <add>, %0, %cst [1] : vector<8x32xf32> to vector<8xf32>
    %4 = vector.shape_cast %3 : vector<8xf32> to vector<8x1xf32>
    %cst_5 = arith.constant 3.200000e+01 : f32
    %5 = vector.broadcast %cst_5 : f32 to vector<8x1xf32>
    %6 = arith.divf %4, %5 : vector<8x1xf32>
    %7 = vector.broadcast %6 : vector<8x1xf32> to vector<8x32xf32>
    %8 = arith.subf %0, %7 : vector<8x32xf32>
    %9 = arith.mulf %8, %8 : vector<8x32xf32>
    %cst_6 = arith.constant dense<0.000000e+00> : vector<8xf32>
    %10 = vector.multi_reduction <add>, %9, %cst_6 [1] : vector<8x32xf32> to vector<8xf32>
    %11 = vector.shape_cast %10 : vector<8xf32> to vector<8x1xf32>
    %cst_7 = arith.constant 3.200000e+01 : f32
    %12 = vector.broadcast %cst_7 : f32 to vector<8x1xf32>
    %13 = arith.divf %11, %12 : vector<8x1xf32>
    %cst_8 = arith.constant 9.99999974E-6 : f32
    %14 = vector.broadcast %cst_8 : f32 to vector<8x1xf32>
    %15 = arith.addf %13, %14 : vector<8x1xf32>
    %16 = math.rsqrt %15 : vector<8x1xf32>
    %17 = vector.broadcast %16 : vector<8x1xf32> to vector<8x32xf32>
    %18 = arith.mulf %8, %17 : vector<8x32xf32>
    %19 = vector.broadcast %1 : vector<1x32xf32> to vector<8x32xf32>
    %20 = arith.mulf %18, %19 : vector<8x32xf32>
    %21 = vector.broadcast %2 : vector<1x32xf32> to vector<8x32xf32>
    %22 = arith.addf %20, %21 : vector<8x32xf32>
    %c0_9 = arith.constant 0 : index
    %c0_10 = arith.constant 0 : index
    %23 = vector.load %arg4[%c0_9, %c0_10] : memref<32x384xf32, #tpu.memory_space<vmem>>, vector<32x384xf32>
    %cst_11 = arith.constant dense<0.000000e+00> : vector<8x384xf32>
    %24 = tpu.matmul %22, %23, %cst_11 {dimension_numbers = #tpu.dot_dimension_numbers<[1], [0], [0], [1], [0, 0, 1, 1], [], []>} : vector<8x32xf32>, vector<32x384xf32>, vector<8x384xf32> -> vector<8x384xf32>
    %25 = vector.extract_strided_slice %24 {offsets = [0, 0], sizes = [8, 128], strides = [1, 1]} : vector<8x384xf32> to vector<8x128xf32>
    %26 = vector.extract_strided_slice %24 {offsets = [0, 128], sizes = [8, 128], strides = [1, 1]} : vector<8x384xf32> to vector<8x128xf32>
    %27 = vector.extract_strided_slice %24 {offsets = [0, 256], sizes = [8, 128], strides = [1, 1]} : vector<8x384xf32> to vector<8x128xf32>
    %cst_12 = arith.constant 0.000000e+00 : f32
    %28 = vector.broadcast %cst_12 : f32 to vector<8x32xf32>
    %29 = vector.extract_strided_slice %25 {offsets = [0, 0], sizes = [8, 64], strides = [1, 1]} : vector<8x128xf32> to vector<8x64xf32>
    %30 = vector.extract_strided_slice %26 {offsets = [0, 0], sizes = [8, 64], strides = [1, 1]} : vector<8x128xf32> to vector<8x64xf32>
    %31 = vector.extract_strided_slice %27 {offsets = [0, 0], sizes = [8, 64], strides = [1, 1]} : vector<8x128xf32> to vector<8x64xf32>
    %cst_13 = arith.constant dense<0.000000e+00> : vector<8x8xf32>
    %32 = tpu.matmul %29, %30, %cst_13 {dimension_numbers = #tpu.dot_dimension_numbers<[1], [1], [0], [0], [0, 0, 1, 0], [], []>} : vector<8x64xf32>, vector<8x64xf32>, vector<8x8xf32> -> vector<8x8xf32>
    %cst_14 = arith.constant 2.500000e-01 : f32
    %33 = vector.broadcast %cst_14 : f32 to vector<8x8xf32>
    %34 = arith.mulf %32, %33 : vector<8x8xf32>
    %cst_15 = arith.constant dense<0xFF800000> : vector<8xf32>
    %35 = vector.multi_reduction <maximumf>, %34, %cst_15 [1] : vector<8x8xf32> to vector<8xf32>
    %36 = vector.shape_cast %35 : vector<8xf32> to vector<8x1xf32>
    %37 = vector.broadcast %36 : vector<8x1xf32> to vector<8x8xf32>
    %38 = arith.subf %34, %37 : vector<8x8xf32>
    %39 = math.exp %38 : vector<8x8xf32>
    %cst_16 = arith.constant dense<0.000000e+00> : vector<8xf32>
    %40 = vector.multi_reduction <add>, %39, %cst_16 [1] : vector<8x8xf32> to vector<8xf32>
    %41 = vector.shape_cast %40 : vector<8xf32> to vector<8x1xf32>
    %42 = tpu.reciprocal %41 {approx = true} : vector<8x1xf32> -> vector<8x1xf32>
    %43 = vector.broadcast %42 : vector<8x1xf32> to vector<8x8xf32>
    %44 = arith.mulf %39, %43 : vector<8x8xf32>
    %cst_17 = arith.constant dense<0.000000e+00> : vector<8x64xf32>
    %45 = tpu.matmul %44, %31, %cst_17 {dimension_numbers = #tpu.dot_dimension_numbers<[1], [0], [0], [1], [0, 0, 1, 1], [], []>} : vector<8x8xf32>, vector<8x64xf32>, vector<8x64xf32> -> vector<8x64xf32>
    %c0_18 = arith.constant 0 : index
    %c0_19 = arith.constant 0 : index
    %46 = vector.load %arg5[%c0_18, %c0_19] : memref<128x32xf32, #tpu.memory_space<vmem>>, vector<64x32xf32>
    %cst_20 = arith.constant dense<0.000000e+00> : vector<8x32xf32>
    %47 = tpu.matmul %45, %46, %cst_20 {dimension_numbers = #tpu.dot_dimension_numbers<[1], [0], [0], [1], [0, 0, 1, 1], [], []>} : vector<8x64xf32>, vector<64x32xf32>, vector<8x32xf32> -> vector<8x32xf32>
    %48 = arith.addf %28, %47 : vector<8x32xf32>
    %49 = vector.extract_strided_slice %25 {offsets = [0, 64], sizes = [8, 64], strides = [1, 1]} : vector<8x128xf32> to vector<8x64xf32>
    %50 = vector.extract_strided_slice %26 {offsets = [0, 64], sizes = [8, 64], strides = [1, 1]} : vector<8x128xf32> to vector<8x64xf32>
    %51 = vector.extract_strided_slice %27 {offsets = [0, 64], sizes = [8, 64], strides = [1, 1]} : vector<8x128xf32> to vector<8x64xf32>
    %cst_21 = arith.constant dense<0.000000e+00> : vector<8x8xf32>
    %52 = tpu.matmul %49, %50, %cst_21 {dimension_numbers = #tpu.dot_dimension_numbers<[1], [1], [0], [0], [0, 0, 1, 0], [], []>} : vector<8x64xf32>, vector<8x64xf32>, vector<8x8xf32> -> vector<8x8xf32>
    %cst_22 = arith.constant 2.500000e-01 : f32
    %53 = vector.broadcast %cst_22 : f32 to vector<8x8xf32>
    %54 = arith.mulf %52, %53 : vector<8x8xf32>
    %cst_23 = arith.constant dense<0xFF800000> : vector<8xf32>
    %55 = vector.multi_reduction <maximumf>, %54, %cst_23 [1] : vector<8x8xf32> to vector<8xf32>
    %56 = vector.shape_cast %55 : vector<8xf32> to vector<8x1xf32>
    %57 = vector.broadcast %56 : vector<8x1xf32> to vector<8x8xf32>
    %58 = arith.subf %54, %57 : vector<8x8xf32>
    %59 = math.exp %58 : vector<8x8xf32>
    %cst_24 = arith.constant dense<0.000000e+00> : vector<8xf32>
    %60 = vector.multi_reduction <add>, %59, %cst_24 [1] : vector<8x8xf32> to vector<8xf32>
    %61 = vector.shape_cast %60 : vector<8xf32> to vector<8x1xf32>
    %62 = tpu.reciprocal %61 {approx = true} : vector<8x1xf32> -> vector<8x1xf32>
    %63 = vector.broadcast %62 : vector<8x1xf32> to vector<8x8xf32>
    %64 = arith.mulf %59, %63 : vector<8x8xf32>
    %cst_25 = arith.constant dense<0.000000e+00> : vector<8x64xf32>
    %65 = tpu.matmul %64, %51, %cst_25 {dimension_numbers = #tpu.dot_dimension_numbers<[1], [0], [0], [1], [0, 0, 1, 1], [], []>} : vector<8x8xf32>, vector<8x64xf32>, vector<8x64xf32> -> vector<8x64xf32>
    %c64 = arith.constant 64 : index
    %c0_26 = arith.constant 0 : index
    %66 = vector.load %arg5[%c64, %c0_26] : memref<128x32xf32, #tpu.memory_space<vmem>>, vector<64x32xf32>
    %cst_27 = arith.constant dense<0.000000e+00> : vector<8x32xf32>
    %67 = tpu.matmul %65, %66, %cst_27 {dimension_numbers = #tpu.dot_dimension_numbers<[1], [0], [0], [1], [0, 0, 1, 1], [], []>} : vector<8x64xf32>, vector<64x32xf32>, vector<8x32xf32> -> vector<8x32xf32>
    %68 = arith.addf %48, %67 : vector<8x32xf32>
    %c0_28 = arith.constant 0 : index
    %c0_29 = arith.constant 0 : index
    %69 = vector.load %arg6[%c0_28, %c0_29] : memref<1x32xf32, #tpu.memory_space<vmem>>, vector<1x32xf32>
    %70 = vector.broadcast %69 : vector<1x32xf32> to vector<8x32xf32>
    %71 = arith.addf %68, %70 : vector<8x32xf32>
    %cst_30 = arith.constant 0.000000e+00 : f32
    %72 = vector.broadcast %cst_30 : f32 to vector<8x32xf32>
    %73 = arith.cmpf ogt, %71, %72 : vector<8x32xf32>
    %cst_31 = arith.constant 0.00999999977 : f32
    %74 = vector.broadcast %cst_31 : f32 to vector<8x32xf32>
    %75 = arith.mulf %74, %71 : vector<8x32xf32>
    %76 = arith.select %73, %71, %75 : vector<8x32xi1>, vector<8x32xf32>
    %c0_32 = arith.constant 0 : index
    %c0_33 = arith.constant 0 : index
    %77 = vector.load %arg7[%c0_32, %c0_33] : memref<8x32xf32, #tpu.memory_space<vmem>>, vector<8x32xf32>
    tpu.vector_store %arg7[%c0_32, %c0_33], %76 {strides = array<i32>} : memref<8x32xf32, #tpu.memory_space<vmem>>, vector<8x32xf32>,
    return
  }
  func.func @transform_0(%arg0: i32) -> (i32, i32) {
    %c0_i32 = arith.constant 0 : i32
    %c0_i32_0 = arith.constant 0 : i32
    return %arg0, %c0_i32 : i32, i32
  }
  func.func @transform_1(%arg0: i32) -> (i32, i32) {
    %c0_i32 = arith.constant 0 : i32
    %c0_i32_0 = arith.constant 0 : i32
    %c0_i32_1 = arith.constant 0 : i32
    return %c0_i32, %c0_i32_0 : i32, i32
  }
  func.func @transform_2(%arg0: i32) -> (i32, i32) {
    %c0_i32 = arith.constant 0 : i32
    %c0_i32_0 = arith.constant 0 : i32
    %c0_i32_1 = arith.constant 0 : i32
    return %c0_i32, %c0_i32_0 : i32, i32
  }
  func.func @transform_3(%arg0: i32) -> (i32, i32) {
    %c0_i32 = arith.constant 0 : i32
    %c0_i32_0 = arith.constant 0 : i32
    %c0_i32_1 = arith.constant 0 : i32
    return %c0_i32, %c0_i32_0 : i32, i32
  }
  func.func @transform_4(%arg0: i32) -> (i32, i32) {
    %c0_i32 = arith.constant 0 : i32
    %c0_i32_0 = arith.constant 0 : i32
    %c0_i32_1 = arith.constant 0 : i32
    return %c0_i32, %c0_i32_0 : i32, i32
  }
  func.func @transform_5(%arg0: i32) -> (i32, i32) {
    %c0_i32 = arith.constant 0 : i32
    %c0_i32_0 = arith.constant 0 : i32
    %c0_i32_1 = arith.constant 0 : i32
    return %c0_i32, %c0_i32_0 : i32, i32
  }
  func.func @transform_6(%arg0: i32) -> (i32, i32) {
    %c0_i32 = arith.constant 0 : i32
    %c0_i32_0 = arith.constant 0 : i32
    return %arg0, %c0_i32 : i32, i32
  }
}

</mosaic_0001>

<llo_original>
// kernel: tpu_custom_call.1
$region0: #{tpu_custom_call.1}
  #allocation0 [shape = 'u32[]', space=smem, size = 0x4, offset = 0x4, fixed_abs, tag = 'smem constant byte address 0x4 - core index']
  #allocation1 [shape = 'u32[72,128]{1,0:T(1,128)}', space=vmem, size = 0x9000, scoped, tag = 'internal scratch']
  %s0 = inlined_call_operand.vmem [shape: f32[16,32], index: 0, kind: input, shape index: {}]
  %s1 = inlined_call_operand.vmem [shape: f32[1,32], index: 1, kind: input, shape index: {}]
  %s2 = inlined_call_operand.vmem [shape: f32[1,32], index: 2, kind: input, shape index: {}]
  %s3 = inlined_call_operand.vmem [shape: f32[32,384], index: 3, kind: input, shape index: {}]
  %s4 = inlined_call_operand.vmem [shape: f32[128,32], index: 4, kind: input, shape index: {}]
  %s5 = inlined_call_operand.vmem [shape: f32[1,32], index: 5, kind: input, shape index: {}]
  %s6 = inlined_call_operand.hbm [shape: f32[16,32], index: 6, kind: output, shape index: {}]
  %s7 = sld [smem:[#allocation0]]
  $region57: #{tpu_custom_call.1} parent=0
    _
  %s9 = ssub.s32 1, %s7
  %s10 = scalar_select 0, %s9, %s7
  $region1: #{tpu_custom_call.1} parent=0
    #allocation2 [shape = 'u8[8192]{0}', space=vmem, size = 0x2000, scoped, tag = 'output window, operand 0']
    #allocation3 [shape = 's32[2]{0}', space=sflag, size = 0x8, scoped, tag = 'scoped memory for tpu_custom_call.1']
    %11 = vsyncpa [#allocation3], 0
    %s12 = scalar_lea.sflag [#allocation3], 1
    %13 = vsyncpa %s12, 0
    loop: start=0, step=1, limit=4
    $region2: #{tpu_custom_call.1} parent=1 // loop_pre_header
      _
    $region3: #{tpu_custom_call.1} parent=1 // loop_header
      %s15 = sphi 0, %s19
      %p16 = scmp.ge.s32.totalorder %s15, 4
      %s25 = sphi 0, %s27
      %s28 = sphi 0, %s25
      %s29 = sphi 0, %s28
      %s45 = sphi 0, %s29
      %s49 = sphi 0, %s49
      %s51 = sphi 0, %s49
      %s52 = sphi 0, %s51
      %s66 = sphi 0, %s52
      %s70 = sphi 0, %s70
      %s72 = sphi 0, %s70
      %s73 = sphi 0, %s72
      %s87 = sphi 0, %s73
      %s91 = sphi 0, %s91
      %s93 = sphi 0, %s91
      %s94 = sphi 0, %s93
      %s108 = sphi 0, %s94
      %s112 = sphi 0, %s112
      %s114 = sphi 0, %s112
      %s115 = sphi 0, %s114
      %s129 = sphi 0, %s115
      %s133 = sphi 0, %s133
      %s135 = sphi 0, %s133
      %s136 = sphi 0, %s135
      %s150 = sphi 0, %s136
      %s156 = sphi 0, %s158
      %s159 = sphi 0, %s156
      %s160 = sphi 0, %s159
      %s176 = sphi 0, %s160
    $region4: #{tpu_custom_call.1} parent=1 // loop_header_branch
      %18 = sbr.rel (%p16) target = $region8
    $region5: #{tpu_custom_call.1} parent=1 // loop_body
      %s20 = ssub.s32 %s15, 1
      %s21 = ssub.s32 %s15, 2
      %s22 = sadd.s32 %s15, 1
      %s23 = ssub.s32 %s15, %s22
      %p24 = scmp.eq.s32.totalorder %s23, 0
      %s26 = sadd.s32 %s25, 1
      %s27 = scalar_select %p24, %s25, %s26
      %p30 = pneg %p24
      %p31 = scmp.eq.s32.totalorder %s15, 1
      %p32 = por %p30, %p31
      %p33 = scmp.ne.s32.totalorder %s25, %s28
      %p34 = scmp.eq.s32.totalorder %s15, 0
      %p35 = por %p33, %p34
      %p36 = scmp.ne.s32.totalorder %s25, %s28
      %p37 = scmp.eq.s32.totalorder %s20, 1
      %p38 = por %p36, %p37
      %p39 = scmp.ne.s32.totalorder %s28, %s29
      %p40 = scmp.eq.s32.totalorder %s20, 0
      %p41 = por %p39, %p40
      %p42 = scmp.ne.s32.totalorder %s28, %s29
      %p43 = scmp.eq.s32.totalorder %s21, 1
      %p44 = por %p42, %p43
      %p46 = scmp.ne.s32.totalorder %s29, %s45
      %p47 = scmp.eq.s32.totalorder %s21, 0
      %p48 = por %p46, %p47
      %s50 = sadd.s32 %s49, 1
      %p53 = scmp.eq.s32.totalorder %s15, 1
      %p54 = scmp.ne.s32.totalorder %s49, %s51
      %p55 = scmp.eq.s32.totalorder %s15, 0
      %p56 = por %p54, %p55
      %p57 = scmp.ne.s32.totalorder %s49, %s51
      %p58 = scmp.eq.s32.totalorder %s20, 1
      %p59 = por %p57, %p58
      %p60 = scmp.ne.s32.totalorder %s51, %s52
      %p61 = scmp.eq.s32.totalorder %s20, 0
      %p62 = por %p60, %p61
      %p63 = scmp.ne.s32.totalorder %s51, %s52
      %p64 = scmp.eq.s32.totalorder %s21, 1
      %p65 = por %p63, %p64
      %p67 = scmp.ne.s32.totalorder %s52, %s66
      %p68 = scmp.eq.s32.totalorder %s21, 0
      %p69 = por %p67, %p68
      %s71 = sadd.s32 %s70, 1
      %p74 = scmp.eq.s32.totalorder %s15, 1
      %p75 = scmp.ne.s32.totalorder %s70, %s72
      %p76 = scmp.eq.s32.totalorder %s15, 0
      %p77 = por %p75, %p76
      %p78 = scmp.ne.s32.totalorder %s70, %s72
      %p79 = scmp.eq.s32.totalorder %s20, 1
      %p80 = por %p78, %p79
      %p81 = scmp.ne.s32.totalorder %s72, %s73
      %p82 = scmp.eq.s32.totalorder %s20, 0
      %p83 = por %p81, %p82
      %p84 = scmp.ne.s32.totalorder %s72, %s73
      %p85 = scmp.eq.s32.totalorder %s21, 1
      %p86 = por %p84, %p85
      %p88 = scmp.ne.s32.totalorder %s73, %s87
      %p89 = scmp.eq.s32.totalorder %s21, 0
      %p90 = por %p88, %p89
      %s92 = sadd.s32 %s91, 1
      %p95 = scmp.eq.s32.totalorder %s15, 1
      %p96 = scmp.ne.s32.totalorder %s91, %s93
      %p97 = scmp.eq.s32.totalorder %s15, 0
      %p98 = por %p96, %p97
      %p99 = scmp.ne.s32.totalorder %s91, %s93
      %p100 = scmp.eq.s32.totalorder %s20, 1
      %p101 = por %p99, %p100
      %p102 = scmp.ne.s32.totalorder %s93, %s94
      %p103 = scmp.eq.s32.totalorder %s20, 0
      %p104 = por %p102, %p103
      %p105 = scmp.ne.s32.totalorder %s93, %s94
      %p106 = scmp.eq.s32.totalorder %s21, 1
      %p107 = por %p105, %p106
      %p109 = scmp.ne.s32.totalorder %s94, %s108
      %p110 = scmp.eq.s32.totalorder %s21, 0
      %p111 = por %p109, %p110
      %s113 = sadd.s32 %s112, 1
      %p116 = scmp.eq.s32.totalorder %s15, 1
      %p117 = scmp.ne.s32.totalorder %s112, %s114
      %p118 = scmp.eq.s32.totalorder %s15, 0
      %p119 = por %p117, %p118
      %p120 = scmp.ne.s32.totalorder %s112, %s114
      %p121 = scmp.eq.s32.totalorder %s20, 1
      %p122 = por %p120, %p121
      %p123 = scmp.ne.s32.totalorder %s114, %s115
      %p124 = scmp.eq.s32.totalorder %s20, 0
      %p125 = por %p123, %p124
      %p126 = scmp.ne.s32.totalorder %s114, %s115
      %p127 = scmp.eq.s32.totalorder %s21, 1
      %p128 = por %p126, %p127
      %p130 = scmp.ne.s32.totalorder %s115, %s129
      %p131 = scmp.eq.s32.totalorder %s21, 0
      %p132 = por %p130, %p131
      %s134 = sadd.s32 %s133, 1
      %p137 = scmp.eq.s32.totalorder %s15, 1
      %p138 = scmp.ne.s32.totalorder %s133, %s135
      %p139 = scmp.eq.s32.totalorder %s15, 0
      %p140 = por %p138, %p139
      %p141 = scmp.ne.s32.totalorder %s133, %s135
      %p142 = scmp.eq.s32.totalorder %s20, 1
      %p143 = por %p141, %p142
      %p144 = scmp.ne.s32.totalorder %s135, %s136
      %p145 = scmp.eq.s32.totalorder %s20, 0
      %p146 = por %p144, %p145
      %p147 = scmp.ne.s32.totalorder %s135, %s136
      %p148 = scmp.eq.s32.totalorder %s21, 1
      %p149 = por %p147, %p148
      %p151 = scmp.ne.s32.totalorder %s136, %s150
      %p152 = scmp.eq.s32.totalorder %s21, 0
      %p153 = por %p151, %p152
      %s154 = ssub.s32 %s15, %s22
      %p155 = scmp.eq.s32.totalorder %s154, 0
      %s157 = sadd.s32 %s156, 1
      %s158 = scalar_select %p155, %s156, %s157
      %p161 = pneg %p155
      %p162 = scmp.eq.s32.totalorder %s15, 1
      %p163 = por %p161, %p162
      %p164 = scmp.ne.s32.totalorder %s156, %s159
      %p165 = scmp.eq.s32.totalorder %s15, 0
      %p166 = por %p164, %p165
      %p167 = scmp.ne.s32.totalorder %s156, %s159
      %p168 = scmp.eq.s32.totalorder %s20, 1
      %p169 = por %p167, %p168
      %p170 = scmp.ne.s32.totalorder %s159, %s160
      %p171 = scmp.eq.s32.totalorder %s20, 0
      %p172 = por %p170, %p171
      %p173 = scmp.ne.s32.totalorder %s159, %s160
      %p174 = scmp.eq.s32.totalorder %s21, 1
      %p175 = por %p173, %p174
      %p177 = scmp.ne.s32.totalorder %s160, %s176
      %p178 = scmp.eq.s32.totalorder %s21, 0
      %p179 = por %p177, %p178
      %p180 = scmp.le.s32.totalorder 1, %s15
      %p181 = scmp.lt.s32.totalorder %s15, 3
      %p182 = pnand %p180, %p181
      %p183 = pneg %p182
      // Predicated region
      $region9: #{tpu_custom_call.1} parent=5 // pred_check
        _
      $region10: #{tpu_custom_call.1} parent=5 // pred_check_branch
        %185 = sbr.rel (%p182) target = $region12
      $region11: #{tpu_custom_call.1} parent=5 // pred_region
        %s186 = ssub.s32 %s15, 1
        // Predicated region
        $region13: #{tpu_custom_call.1} parent=11 // pred_check
          %p187 = pneg %p62
        $region14: #{tpu_custom_call.1} parent=11 // pred_check_branch
          %189 = sbr.rel (%p187) target = $region16
        $region15: #{tpu_custom_call.1} parent=11 // pred_region
          _
        $region16: #{tpu_custom_call.1} parent=11 // pred_fallthru
          _
        // Predicated region
        $region17: #{tpu_custom_call.1} parent=11 // pred_check
          %p190 = pneg %p83
        $region18: #{tpu_custom_call.1} parent=11 // pred_check_branch
          %192 = sbr.rel (%p190) target = $region20
        $region19: #{tpu_custom_call.1} parent=11 // pred_region
          _
        $region20: #{tpu_custom_call.1} parent=11 // pred_fallthru
          _
        // Predicated region
        $region21: #{tpu_custom_call.1} parent=11 // pred_check
          %p193 = pneg %p104
        $region22: #{tpu_custom_call.1} parent=11 // pred_check_branch
          %195 = sbr.rel (%p193) target = $region24
        $region23: #{tpu_custom_call.1} parent=11 // pred_region
          _
        $region24: #{tpu_custom_call.1} parent=11 // pred_fallthru
          _
        // Predicated region
        $region25: #{tpu_custom_call.1} parent=11 // pred_check
          %p196 = pneg %p125
        $region26: #{tpu_custom_call.1} parent=11 // pred_check_branch
          %198 = sbr.rel (%p196) target = $region28
        $region27: #{tpu_custom_call.1} parent=11 // pred_region
          _
        $region28: #{tpu_custom_call.1} parent=11 // pred_fallthru
          _
        // Predicated region
        $region29: #{tpu_custom_call.1} parent=11 // pred_check
          %p199 = pneg %p146
        $region30: #{tpu_custom_call.1} parent=11 // pred_check_branch
          %201 = sbr.rel (%p199) target = $region32
        $region31: #{tpu_custom_call.1} parent=11 // pred_region
          _
        $region32: #{tpu_custom_call.1} parent=11 // pred_fallthru
          _
      $region12: #{tpu_custom_call.1} parent=5 // pred_fallthru
        _
      %p202 = scmp.lt.s32.totalorder %s15, 2
      // Predicated region
      $region33: #{tpu_custom_call.1} parent=5 // pred_check
        %p203 = pneg %p202
      $region34: #{tpu_custom_call.1} parent=5 // pred_check_branch
        %205 = sbr.rel (%p203) target = $region36
      $region35: #{tpu_custom_call.1} parent=5 // pred_region
        // Predicated region
        $region37: #{tpu_custom_call.1} parent=35 // pred_check
          %p206 = pneg %p35
        $region38: #{tpu_custom_call.1} parent=35 // pred_check_branch
          %208 = sbr.rel (%p206) target = $region40
        $region39: #{tpu_custom_call.1} parent=35 // pred_region
          %p209 = scmp.lt.s32.totalorder %s15, 1
          %s210 = scalar_select %p209, %s15, 1
          %s211 = smul.addr %s210, 8
          %s212 = scalar_lea.vmem %s0, %s211
        $region40: #{tpu_custom_call.1} parent=35 // pred_fallthru
          _
      $region36: #{tpu_custom_call.1} parent=5 // pred_fallthru
        _
      %p213 = scmp.le.s32.totalorder 1, %s15
      %p214 = scmp.lt.s32.totalorder %s15, 3
      %p215 = pnand %p213, %p214
      %p216 = pneg %p215
      // Predicated region
      $region41: #{tpu_custom_call.1} parent=5 // pred_check
        _
      $region42: #{tpu_custom_call.1} parent=5 // pred_check_branch
        %218 = sbr.rel (%p215) target = $region44
      $region43: #{tpu_custom_call.1} parent=5 // pred_region
        %s219 = ssub.s32 %s15, 1
        %p220 = scmp.lt.s32.totalorder %s20, 1
        %s221 = scalar_select %p220, %s20, 1
        %s222 = smul.addr %s221, 8
        %s223 = scalar_lea.vmem %s0, %s222
        %p224 = pneg %p41
        %p225 = pneg %p38
        %p226 = pneg %p62
        %p227 = pneg %p59
        %p228 = pneg %p83
        %p229 = pneg %p80
        %p230 = pneg %p104
        %p231 = pneg %p101
        %p232 = pneg %p125
        %p233 = pneg %p122
        %p234 = pneg %p146
        %p235 = pneg %p143
        %p236 = pneg %p172
        %p237 = pneg %p169
        %s238 = sand.u32 %s159, 1
        %s239 = scalar_lea.sflag [#allocation3], %s238
        %s240 = sand.u32 %s159, 1
        %s241 = smul.addr %s240, 8
        %s242 = scalar_lea.vmem [#allocation2], %s241
        %p243 = scmp.lt.s32.totalorder %s20, 1
        %s244 = scalar_select %p243, %s20, 1
        %s245 = smul.addr %s244, 8
        %s246 = scalar_lea.vmem %s0, %s245
        %v247 = vld [vmem:[%s246] sm:$0xff]
        %v248 = vld [vmem:[%s1] sm:$0x1]
        %v249 = vld [vmem:[%s2] sm:$0x1]
        %vm250 = vcmask 261120
        %v251 = vsel %vm250, %v247, 0.0
        %252 = vadd.xlane.f32.xlu0 %v251
        %v253 = vpop.xlane.xlu0 %252
        %v254 = vrcp.pop 32.0
        %v255 = vmul.f32 32.0, %v254
        %v256 = vsub.f32 1.0, %v255
        %v257 = vmul.f32 %v254, %v256
        %v258 = vadd.f32 %v254, %v257
        %vm259 = vweird.f32 %v254
        %v260 = vsel %vm259, %v254, %v258
        %v261 = vmul.f32 %v253, %v260
        %v262 = vsub.f32 %v247, %v261
        %v263 = vmul.f32 %v262, %v262
        %v264 = vsel %vm250, %v263, 0.0
        %265 = vadd.xlane.f32.xlu0 %v264
        %v266 = vpop.xlane.xlu0 %265
        %v267 = vmul.f32 %v266, %v260
        %v268 = vadd.f32 %v267, 1e-05
        %v269 = vrsqrt.pop %v268
        %v270 = vmul.f32 %v269, %v268
        %v271 = vmul.f32 %v270, %v269
        %v272 = vmul.f32 0.5, %v271
        %v273 = vsub.f32 1.5, %v272
        %v274 = vmul.f32 %v269, %v273
        %vm275 = vweird.f32 %v268
        %vm276 = vweird.f32 %v269
        %vm277 = vmor %vm275, %vm276
        %v278 = vsel %vm277, %v269, %v274
        %v279 = vmul.f32 %v262, %v278
        %v281 = vperm.slane %v248, 0
        %v283 = vmul.f32 %v279, %v281
        %v285 = vperm.slane %v249, 0
        %v287 = vadd.f32 %v283, %v285
        %v288 = vld [vmem:[%s3] sm:$0xff]
        %v289 = vld [vmem:[%s3 + $0x8] sm:$0xff]
        %v290 = vld [vmem:[%s3 + $0x10] sm:$0xff]
        %v291 = vld [vmem:[%s3 + $0x18] sm:$0xff]
        %v292 = vld [vmem:[%s3 + $0x20] sm:$0xff]
        %v293 = vld [vmem:[%s3 + $0x28] sm:$0xff]
        %v294 = vld [vmem:[%s3 + $0x30] sm:$0xff]
        %v295 = vld [vmem:[%s3 + $0x38] sm:$0xff]
        %v296 = vld [vmem:[%s3 + $0x40] sm:$0xff]
        %v297 = vld [vmem:[%s3 + $0x48] sm:$0xff]
        %v298 = vld [vmem:[%s3 + $0x50] sm:$0xff]
        %v299 = vld [vmem:[%s3 + $0x58] sm:$0xff]
        %v301 = vsel %vm250, %v287, 0
        %303 = vmatpush.msra.mxu0 0.0
        %304 = vmatpush.msra.mxu0 0.0
        %305 = vmatpush.msra.mxu0 0.0
        %306 = vmatpush.msra.mxu0 0.0
        %307 = vmatpush.msra.mxu0 0.0
        %308 = vmatpush.msra.mxu0 0.0
        %309 = vmatpush.msra.mxu0 0.0
        %310 = vmatpush.msra.mxu0 0.0
        %311 = vmatpush.msra.mxu0 0.0
        %312 = vmatpush.msra.mxu0 0.0
        %313 = vmatpush.msra.mxu0 0.0
        %314 = vmatpush.msra.mxu0 0.0
        %315 = vmatpush.msra.mxu0 %v297
        %316 = vmatpush.msra.mxu0 %v294
        %317 = vmatpush.msra.mxu0 %v291
        %318 = vmatpush.msra.mxu0 %v288
        %319 = vmatmul.f32.gmra.mxu0 %v301
        %v320 = vpop.f32.mrf.mxu0
        %v321 = vadd.f32 0.0, %v320
        %322 = vdwg.mxu0
        %323 = vmatpush.msra.mxu0 0.0
        %324 = vmatpush.msra.mxu0 0.0
        %325 = vmatpush.msra.mxu0 0.0
        %326 = vmatpush.msra.mxu0 0.0
        %327 = vmatpush.msra.mxu0 0.0
        %328 = vmatpush.msra.mxu0 0.0
        %329 = vmatpush.msra.mxu0 0.0
        %330 = vmatpush.msra.mxu0 0.0
        %331 = vmatpush.msra.mxu0 0.0
        %332 = vmatpush.msra.mxu0 0.0
        %333 = vmatpush.msra.mxu0 0.0
        %334 = vmatpush.msra.mxu0 0.0
        %335 = vmatpush.msra.mxu0 %v298
        %336 = vmatpush.msra.mxu0 %v295
        %337 = vmatpush.msra.mxu0 %v292
        %338 = vmatpush.msra.mxu0 %v289
        %339 = vmatmul.f32.gmra.mxu0 %v301
        %v340 = vpop.f32.mrf.mxu0
        %v341 = vadd.f32 0.0, %v340
        %342 = vdwg.mxu0
        %343 = vmatpush.msra.mxu0 0.0
        %344 = vmatpush.msra.mxu0 0.0
        %345 = vmatpush.msra.mxu0 0.0
        %346 = vmatpush.msra.mxu0 0.0
        %347 = vmatpush.msra.mxu0 0.0
        %348 = vmatpush.msra.mxu0 0.0
        %349 = vmatpush.msra.mxu0 0.0
        %350 = vmatpush.msra.mxu0 0.0
        %351 = vmatpush.msra.mxu0 0.0
        %352 = vmatpush.msra.mxu0 0.0
        %353 = vmatpush.msra.mxu0 0.0
        %354 = vmatpush.msra.mxu0 0.0
        %355 = vmatpush.msra.mxu0 %v299
        %356 = vmatpush.msra.mxu0 %v296
        %357 = vmatpush.msra.mxu0 %v293
        %358 = vmatpush.msra.mxu0 %v290
        %359 = vmatmul.f32.gmra.mxu0 %v301
        %v360 = vpop.f32.mrf.mxu0
        %v361 = vadd.f32 0.0, %v360
        %362 = vdwg.mxu0
        %vm363 = vcmask 523264
        %v365 = vsel %vm363, %v321, 0
        %v368 = vsel %vm363, %v341, 0
        %370 = vmatpush.xpose.msra.mxu0 0.0
        %371 = vmatpush.xpose.msra.mxu0 0.0
        %372 = vmatpush.xpose.msra.mxu0 0.0
        %373 = vmatpush.xpose.msra.mxu0 0.0
        %374 = vmatpush.xpose.msra.mxu0 0.0
        %375 = vmatpush.xpose.msra.mxu0 0.0
        %376 = vmatpush.xpose.msra.mxu0 0.0
        %377 = vmatpush.xpose.msra.mxu0 0.0
        %378 = vmatpush.xpose.msra.mxu0 0.0
        %379 = vmatpush.xpose.msra.mxu0 0.0
        %380 = vmatpush.xpose.msra.mxu0 0.0
        %381 = vmatpush.xpose.msra.mxu0 0.0
        %382 = vmatpush.xpose.msra.mxu0 0.0
        %383 = vmatpush.xpose.msra.mxu0 0.0
        %384 = vmatpush.xpose.msra.mxu0 0.0
        %385 = vmatpush.xpose.msra.mxu0 %v368
        %386 = vmatmul.f32.gmra.mxu0 %v365
        %v387 = vpop.f32.mrf.mxu0
        %v388 = vadd.f32 0.0, %v387
        %389 = vdwg.mxu0
        %v390 = vmul.f32 %v388, 0.25
        %vm391 = vcmask 64512
        %v392 = vsel %vm391, %v390, -inf
        %393 = vmax.xlane.f32.xlu0 %v392
        %v394 = vpop.xlane.xlu0 %393
        %v395 = vsub.f32 %v390, %v394
        %v396 = vmul.f32 %v395, 1.442695
        %v397 = vpow.pop %v396
        %v398 = vsel %vm391, %v397, 0.0
        %399 = vadd.xlane.f32.xlu0 %v398
        %v400 = vpop.xlane.xlu0 %399
        %v401 = vrcp.pop %v400
        %v402 = vmul.f32 %v397, %v401
        %v404 = vsel %vm391, %v402, 0
        %406 = vmatpush.msra.mxu0 0.0
        %407 = vmatpush.msra.mxu0 0.0
        %408 = vmatpush.msra.mxu0 0.0
        %409 = vmatpush.msra.mxu0 0.0
        %410 = vmatpush.msra.mxu0 0.0
        %411 = vmatpush.msra.mxu0 0.0
        %412 = vmatpush.msra.mxu0 0.0
        %413 = vmatpush.msra.mxu0 0.0
        %414 = vmatpush.msra.mxu0 0.0
        %415 = vmatpush.msra.mxu0 0.0
        %416 = vmatpush.msra.mxu0 0.0
        %417 = vmatpush.msra.mxu0 0.0
        %418 = vmatpush.msra.mxu0 0.0
        %419 = vmatpush.msra.mxu0 0.0
        %420 = vmatpush.msra.mxu0 0.0
        %421 = vmatpush.msra.mxu0 %v361
        %422 = vmatmul.f32.gmra.mxu0 %v404
        %v423 = vpop.f32.mrf.mxu0
        %v424 = vadd.f32 0.0, %v423
        %425 = vdwg.mxu0
        %v426 = vld [vmem:[%s4] sm:$0xff]
        %v427 = vld [vmem:[%s4 + $0x8] sm:$0xff]
        %v428 = vld [vmem:[%s4 + $0x10] sm:$0xff]
        %v429 = vld [vmem:[%s4 + $0x18] sm:$0xff]
        %v430 = vld [vmem:[%s4 + $0x20] sm:$0xff]
        %v431 = vld [vmem:[%s4 + $0x28] sm:$0xff]
        %v432 = vld [vmem:[%s4 + $0x30] sm:$0xff]
        %v433 = vld [vmem:[%s4 + $0x38] sm:$0xff]
        %434 = vrot.lane.b32.xlu0 %v321, 64
        %v435 = vpop.permute.xlu0 %434
        %436 = vrot.lane.b32.xlu0 %v341, 64
        %v437 = vpop.permute.xlu0 %436
        %v438 = vsel %vm363, %v435, 0
        %v440 = vsel %vm363, %v437, 0
        %442 = vmatpush.xpose.msra.mxu0 0.0
        %443 = vmatpush.xpose.msra.mxu0 0.0
        %444 = vmatpush.xpose.msra.mxu0 0.0
        %445 = vmatpush.xpose.msra.mxu0 0.0
        %446 = vmatpush.xpose.msra.mxu0 0.0
        %447 = vmatpush.xpose.msra.mxu0 0.0
        %448 = vmatpush.xpose.msra.mxu0 0.0
        %449 = vmatpush.xpose.msra.mxu0 0.0
        %450 = vmatpush.xpose.msra.mxu0 0.0
        %451 = vmatpush.xpose.msra.mxu0 0.0
        %452 = vmatpush.xpose.msra.mxu0 0.0
        %453 = vmatpush.xpose.msra.mxu0 0.0
        %454 = vmatpush.xpose.msra.mxu0 0.0
        %455 = vmatpush.xpose.msra.mxu0 0.0
        %456 = vmatpush.xpose.msra.mxu0 0.0
        %457 = vmatpush.xpose.msra.mxu0 %v440
        %458 = vmatmul.f32.gmra.mxu0 %v438
        %v459 = vpop.f32.mrf.mxu0
        %v460 = vadd.f32 0.0, %v459
        %461 = vdwg.mxu0
        %v462 = vmul.f32 %v460, 0.25
        %v463 = vsel %vm391, %v462, -inf
        %464 = vmax.xlane.f32.xlu0 %v463
        %v465 = vpop.xlane.xlu0 %464
        %v466 = vsub.f32 %v462, %v465
        %v467 = vmul.f32 %v466, 1.442695
        %v468 = vpow.pop %v467
        %v469 = vsel %vm391, %v468, 0.0
        %470 = vadd.xlane.f32.xlu0 %v469
        %v471 = vpop.xlane.xlu0 %470
        %v472 = vrcp.pop %v471
        %v473 = vmul.f32 %v468, %v472
        %475 = vrot.lane.b32.xlu0 %v361, 64
        %v476 = vpop.permute.xlu0 %475
        %v479 = vsel %vm391, %v473, 0
        %481 = vmatpush.msra.mxu0 0.0
        %482 = vmatpush.msra.mxu0 0.0
        %483 = vmatpush.msra.mxu0 0.0
        %484 = vmatpush.msra.mxu0 0.0
        %485 = vmatpush.msra.mxu0 0.0
        %486 = vmatpush.msra.mxu0 0.0
        %487 = vmatpush.msra.mxu0 0.0
        %488 = vmatpush.msra.mxu0 0.0
        %489 = vmatpush.msra.mxu0 0.0
        %490 = vmatpush.msra.mxu0 0.0
        %491 = vmatpush.msra.mxu0 0.0
        %492 = vmatpush.msra.mxu0 0.0
        %493 = vmatpush.msra.mxu0 0.0
        %494 = vmatpush.msra.mxu0 0.0
        %495 = vmatpush.msra.mxu0 0.0
        %496 = vmatpush.msra.mxu0 %v476
        %497 = vmatmul.f32.gmra.mxu0 %v479
        %v498 = vpop.f32.mrf.mxu0
        %v499 = vadd.f32 0.0, %v498
        %500 = vdwg.mxu0
        %v501 = vld [vmem:[%s4 + $0x40] sm:$0xff]
        %v502 = vld [vmem:[%s4 + $0x48] sm:$0xff]
        %v503 = vld [vmem:[%s4 + $0x50] sm:$0xff]
        %v504 = vld [vmem:[%s4 + $0x58] sm:$0xff]
        %v505 = vld [vmem:[%s4 + $0x60] sm:$0xff]
        %v506 = vld [vmem:[%s4 + $0x68] sm:$0xff]
        %v507 = vld [vmem:[%s4 + $0x70] sm:$0xff]
        %v508 = vld [vmem:[%s4 + $0x78] sm:$0xff]
        %v510 = vsel %vm363, %v499, 0
        %512 = vmatpush.msra.mxu0 0.0
        %513 = vmatpush.msra.mxu0 0.0
        %514 = vmatpush.msra.mxu0 0.0
        %515 = vmatpush.msra.mxu0 0.0
        %516 = vmatpush.msra.mxu0 0.0
        %517 = vmatpush.msra.mxu0 0.0
        %518 = vmatpush.msra.mxu0 0.0
        %519 = vmatpush.msra.mxu0 0.0
        %520 = vmatpush.msra.mxu0 %v508
        %521 = vmatpush.msra.mxu0 %v507
        %522 = vmatpush.msra.mxu0 %v506
        %523 = vmatpush.msra.mxu0 %v505
        %524 = vmatpush.msra.mxu0 %v504
        %525 = vmatpush.msra.mxu0 %v503
        %526 = vmatpush.msra.mxu0 %v502
        %527 = vmatpush.msra.mxu0 %v501
        %528 = vmatmul.f32.gmra.mxu0 %v510
        %v529 = vpop.f32.mrf.mxu0
        %v530 = vadd.f32 0.0, %v529
        %531 = vdwg.mxu0
        %v533 = vsel %vm363, %v424, 0
        %535 = vmatpush.msra.mxu0 0.0
        %536 = vmatpush.msra.mxu0 0.0
        %537 = vmatpush.msra.mxu0 0.0
        %538 = vmatpush.msra.mxu0 0.0
        %539 = vmatpush.msra.mxu0 0.0
        %540 = vmatpush.msra.mxu0 0.0
        %541 = vmatpush.msra.mxu0 0.0
        %542 = vmatpush.msra.mxu0 0.0
        %543 = vmatpush.msra.mxu0 %v433
        %544 = vmatpush.msra.mxu0 %v432
        %545 = vmatpush.msra.mxu0 %v431
        %546 = vmatpush.msra.mxu0 %v430
        %547 = vmatpush.msra.mxu0 %v429
        %548 = vmatpush.msra.mxu0 %v428
        %549 = vmatpush.msra.mxu0 %v427
        %550 = vmatpush.msra.mxu0 %v426
        %551 = vmatmul.f32.gmra.mxu0 %v533
        %v552 = vpop.f32.mrf.mxu0
        %v553 = vadd.f32 %v530, %v552
        %554 = vdwg.mxu0
        %v555 = vld [vmem:[%s5] sm:$0x1]
        %v557 = vperm.slane %v555, 0
        %v559 = vadd.f32 %v553, %v557
        %vm560 = vcmp.gt.f32.partialorder %v559, 0.0
        %v561 = vmul.f32 %v559, 0.01
        %v562 = vsel %vm560, %v559, %v561
        %563 = vst.msk [vmem:[%s242] sm:$0xff] %vm250, %v562
        %s564 = sand.u32 %s159, 1
        %s565 = scalar_lea.sflag [#allocation3], %s564
        %s566 = sand.u32 %s159, 1
        %s567 = smul.addr %s566, 8
        %s568 = scalar_lea.vmem [#allocation2], %s567
        // Predicated region
        $region45: #{tpu_custom_call.1} parent=43 // pred_check
          %p569 = pneg %p169
        $region46: #{tpu_custom_call.1} parent=43 // pred_check_branch
          %571 = sbr.rel (%p569) target = $region48
        $region47: #{tpu_custom_call.1} parent=43 // pred_region
          %573 = vsyncadd %s565, 0
          %s574 = smul.addr %s20, 8
          %s575 = scalar_lea.hbm %s6, %s574
          %s577 = sshll.u32 %s568, 4
          %s578 = int_to_ptr.vmem [resolvable:$true] %s577
          %s579 = sshll.u32 %s575, 4
          %s580 = int_to_ptr.hbm [resolvable:$true] %s579
          %582 = dma.vmem_to_hbm [thread:$0]  %s578, 128, %s580, %s565
        $region48: #{tpu_custom_call.1} parent=43 // pred_fallthru
          _
      $region44: #{tpu_custom_call.1} parent=5 // pred_fallthru
        _
      %p583 = scmp.le.s32.totalorder 2, %s15
      // Predicated region
      $region49: #{tpu_custom_call.1} parent=5 // pred_check
        %p584 = pneg %p583
      $region50: #{tpu_custom_call.1} parent=5 // pred_check_branch
        %586 = sbr.rel (%p584) target = $region52
      $region51: #{tpu_custom_call.1} parent=5 // pred_region
        %s587 = ssub.s32 %s15, 2
        // Predicated region
        $region53: #{tpu_custom_call.1} parent=51 // pred_check
          %p588 = pneg %p175
        $region54: #{tpu_custom_call.1} parent=51 // pred_check_branch
          %590 = sbr.rel (%p588) target = $region56
        $region55: #{tpu_custom_call.1} parent=51 // pred_region
          %s591 = sand.u32 %s160, 1
          %s592 = scalar_lea.sflag [#allocation3], %s591
          %s593 = sand.u32 %s160, 1
          %s594 = smul.addr %s593, 8
          %s595 = scalar_lea.vmem [#allocation2], %s594
          %597 = dma.done %s592, 128
        $region56: #{tpu_custom_call.1} parent=51 // pred_fallthru
          _
      $region52: #{tpu_custom_call.1} parent=5 // pred_fallthru
        _
    $region6: #{tpu_custom_call.1} parent=1 // loop_footer
      %s19 = sadd.s32 1, %s15
    $region7: #{tpu_custom_call.1} parent=1 // loop_footer_branch
      %14 = sbr.rel target = $region3
    $region8: #{tpu_custom_call.1} parent=1 // loop_exit
      _
    %598 = vsyncpa [#allocation3], 1
    %s599 = scalar_lea.sflag [#allocation3], 1
    %600 = vsyncpa %s599, 1

</llo_original>
